<compile_context>
chip_gen: v7x
topology: tpu7x:2x2x1
jax: 0.10.0
libtpu: 0.0.40
codegen_flags: <defaults>
</compile_context>

<pallas_src>
import functools

import jax
import jax.numpy as jnp
from jax import lax
from jax.experimental import pallas as pl
from jax.experimental.pallas import tpu as pltpu

_LANE = 128
_BYTES_PER_INPUT_PER_STEP = 4 * 1024 * 1024   # ~4 MiB per input per grid step


def _smooth_l1_kernel(yh_ref, y_ref, o_ref, *, block_rows, blocks_per_split,
                      total_rows, need_mask):
    k = pl.program_id(1)

    @pl.when(k == 0)
    def _init():
        o_ref[...] = jnp.zeros_like(o_ref)

    d = yh_ref[...].astype(jnp.float32) - y_ref[...].astype(jnp.float32)
    ad = jnp.abs(d)
    # Branch-free smooth-L1 with beta = 1.0:
    #   |d| <  1 : m = |d|  -> m*(|d| - 0.5*m) = 0.5*d^2
    #   |d| >= 1 : m = 1    -> m*(|d| - 0.5*m) = |d| - 0.5
    m = jnp.minimum(ad, 1.0)
    elem = m * (ad - 0.5 * m)

    def _acc(e):
        # (block_rows,128) -> (block_rows//8, 8, 128): splits exactly on vreg
        # tile boundaries (layout no-op); sum over the leading axis is pure
        # VPU adds (no XLU cross-sublane reduce).  o_ref is the accumulator.
        o_ref[...] += jnp.sum(e.reshape(block_rows // 8, 8, _LANE), axis=0)

    if need_mask:
        # Only the ragged last block (and any clamped redundant split slot)
        # pays for the mask; steady-state blocks accumulate unmasked.
        g = pl.program_id(0) * blocks_per_split + k   # intended global block
        is_ragged = (g + 1) * block_rows > total_rows

        @pl.when(is_ragged)
        def _masked():
            row = g * block_rows + lax.broadcasted_iota(jnp.int32, elem.shape, 0)
            _acc(jnp.where(row < total_rows, elem, 0.0))

        @pl.when(jnp.logical_not(is_ragged))
        def _unmasked():
            _acc(elem)
    else:
        _acc(elem)


def _huber_sum(a, b):
    """Plain-JAX smooth-L1 sum (used for the <128-element tail / tiny inputs)."""
    d = a.astype(jnp.float32) - b.astype(jnp.float32)
    ad = jnp.abs(d)
    m = jnp.minimum(ad, 1.0)
    return jnp.sum(m * (ad - 0.5 * m))


def _is_v7x():
    try:
        kind = jax.devices()[0].device_kind.lower()
    except Exception:
        return False
    return ("v7" in kind) or ("7x" in kind)


def smooth_l1_loss(y_hat, y):
    """Equivalent of nn.SmoothL1Loss()(y_hat, y) -> scalar (mean reduction)."""
    assert y_hat.shape == y.shape, "SmoothL1Loss expects same-shaped inputs"
    n = int(y_hat.size)
    out_dtype = jnp.result_type(y_hat.dtype, y.dtype)
    if not jnp.issubdtype(out_dtype, jnp.floating):
        out_dtype = jnp.float32

    if n == 0:
        # PyTorch returns NaN for an empty input with mean reduction.
        return jnp.asarray(jnp.nan, dtype=out_dtype)

    flat_yh = y_hat.reshape(-1)   # native dtype; the f32 cast happens in-kernel
    flat_y = y.reshape(-1)

    itemsizes = (jnp.dtype(y_hat.dtype).itemsize, jnp.dtype(y.dtype).itemsize)
    sub = max(8, 32 // min(itemsizes))                       # min sublane tile
    max_block_rows = _BYTES_PER_INPUT_PER_STEP // (_LANE * max(itemsizes))

    rows = n // _LANE               # 128-aligned prefix handled by the kernel
    if rows < sub:
        # Tiny input (< one sublane tile of rows): plain JAX is exact and faster.
        total = _huber_sum(flat_yh, flat_y)
        return (total * jnp.float32(1.0 / n)).astype(out_dtype)

    n_aligned = rows * _LANE
    tail = n - n_aligned

    # Tall blocks (multiple of the sublane tile, never larger than the array's
    # row count so all edge blocks are the standard ragged-grid case).
    block_rows = min(max_block_rows, (rows // sub) * sub)
    total_blocks = pl.cdiv(rows, block_rows)

    # 2-way split only where there are two TensorCores (v7x); on single-TC
    # v5e/v6e the leading grid axis has size 1 (no redundant work).
    num_splits = 2 if (_is_v7x() and total_blocks >= 2) else 1
    blocks_per_split = pl.cdiv(total_blocks, num_splits)
    padded_blocks = num_splits * blocks_per_split
    need_mask = (rows % block_rows != 0) or (padded_blocks != total_blocks)

    if padded_blocks == total_blocks:
        def in_map(j, k):
            return (j * blocks_per_split + k, 0)
    else:
        last_block = total_blocks - 1

        def in_map(j, k):
            # Redundant grid slots clamp onto the last real block; their rows
            # are zeroed by the in-kernel mask.
            return (jnp.minimum(j * blocks_per_split + k, last_block), 0)

    # NOTE: when tail == 0 (the common, 128-divisible case) this is a pure
    # bitcast reshape; when tail > 0 XLA may materialize the aligned prefix
    # once (still no full-array pad, and the <=127-element tail is plain JAX).
    yh2 = flat_yh[:n_aligned].reshape(rows, _LANE)
    y2 = flat_y[:n_aligned].reshape(rows, _LANE)

    kernel = functools.partial(
        _smooth_l1_kernel,
        block_rows=block_rows,
        blocks_per_split=blocks_per_split,
        total_rows=rows,
        need_mask=need_mask,
    )

    cost = pl.CostEstimate(
        flops=6 * n_aligned,
        transcendentals=0,
        bytes_accessed=int(yh2.size * yh2.dtype.itemsize
                           + y2.size * y2.dtype.itemsize
                           + num_splits * 8 * _LANE * 4),
    )

    partial_sums = pl.pallas_call(
        kernel,
        out_shape=jax.ShapeDtypeStruct((num_splits * 8, _LANE), jnp.float32),
        grid_spec=pltpu.PrefetchScalarGridSpec(
            num_scalar_prefetch=0,
            grid=(num_splits, blocks_per_split),
            in_specs=[
                pl.BlockSpec((block_rows, _LANE), in_map),
                pl.BlockSpec((block_rows, _LANE), in_map),
            ],
            # Same output block across the reduction axis -> the (8,128) block
            # is the VMEM-resident accumulator; no scratch needed.
            out_specs=pl.BlockSpec((8, _LANE), lambda j, k: (j, 0)),
        ),
        compiler_params=pltpu.CompilerParams(
            # TODO(synk): verify on v7x (xprof) that axis 0 ("parallel") really
            # shards across both TensorCores; switch to pltpu.CORE_PARALLEL if not.
            dimension_semantics=("parallel", "arbitrary"),
            # 2 inputs x 2 pipeline buffers x ~4 MiB = 16 MiB << 32 MiB limit.
            vmem_limit_bytes=32 * 1024 * 1024,
        ),
        cost_estimate=cost,
    )(yh2, y2)

    total = jnp.sum(partial_sums)          # tiny cross-sublane/lane reduce
    if tail:
        total = total + _huber_sum(flat_yh[n_aligned:], flat_y[n_aligned:])

    loss = total * jnp.float32(1.0 / n)    # mean over the ORIGINAL element count
    return loss.astype(out_dtype)


if __name__ == "__main__":
    def reference(y_hat, y):
        d = y_hat.astype(jnp.float32) - y.astype(jnp.float32)
        ad = jnp.abs(d)
        return jnp.mean(jnp.where(ad < 1.0, 0.5 * d * d, ad - 0.5))

    fn = jax.jit(smooth_l1_loss)
    key = jax.random.PRNGKey(0)
    k1, k2, k3, k4, k5, k6 = jax.random.split(key, 6)

    # SmoothL1Loss has no parameters; "N**" inputs -> (2, 4, 16, 16).
    y_hat = jax.random.normal(k1, (2, 4, 16, 16), dtype=jnp.float32)
    y = jax.random.normal(k2, (2, 4, 16, 16), dtype=jnp.float32)
    loss = fn(y_hat, y)
    jax.block_until_ready(loss)
    ref = reference(y_hat, y)
    assert jnp.allclose(loss, ref, rtol=1e-5, atol=1e-6), (loss, ref)

    # Non-128-aligned size: exercises the ragged-block mask + plain-JAX tail.
    y_hat2 = jax.random.normal(k3, (3, 7, 59), dtype=jnp.float32)
    y2 = jax.random.normal(k4, (3, 7, 59), dtype=jnp.float32)
    loss2 = jax.jit(smooth_l1_loss)(y_hat2, y2)
    jax.block_until_ready(loss2)
    ref2 = reference(y_hat2, y2)
    assert jnp.allclose(loss2, ref2, rtol=1e-5, atol=1e-6), (loss2, ref2)

    # bf16 inputs: exercises the 16-row sublane tile path + in-kernel f32 cast.
    y_hat3 = jax.random.normal(k5, (4, 8, 64), dtype=jnp.bfloat16)
    y3 = jax.random.normal(k6, (4, 8, 64), dtype=jnp.bfloat16)
    loss3 = jax.jit(smooth_l1_loss)(y_hat3, y3)
    jax.block_until_ready(loss3)
    ref3 = reference(y_hat3, y3)
    assert jnp.allclose(loss3.astype(jnp.float32), ref3, rtol=1e-2, atol=1e-3), (loss3, ref3)

    print("KERNEL_OK")
</pallas_src>

<mosaic_0001>
module attributes {stable_mosaic.version = 11 : i64} {
  func.func @_smooth_l1_kernel(%arg0: i32, %arg1: i32, %arg2: memref<16x128xf32, #tpu.memory_space<vmem>>, %arg3: memref<16x128xf32, #tpu.memory_space<vmem>>, %arg4: memref<8x128xf32, #tpu.memory_space<vmem>>) attributes {dimension_semantics = [#tpu.dimension_semantics<parallel>, #tpu.dimension_semantics<arbitrary>], iteration_bounds = array<i64: 1, 1>, scalar_prefetch = 0 : i64, scratch_operands = 0 : i64, tpu.core_type = #tpu.core_type<tc>, window_params = [{transform_indices = @transform_0, window_bounds = array<i64: 16, 128>}, {transform_indices = @transform_1, window_bounds = array<i64: 16, 128>}, {transform_indices = @transform_2, window_bounds = array<i64: 8, 128>}]} {
    %c0_i32 = arith.constant 0 : i32
    %0 = arith.cmpi eq, %arg1, %c0_i32 : i32
    %1 = arith.extui %0 : i1 to i32
    %c0_i32_0 = arith.constant 0 : i32
    %2 = arith.cmpi ne, %1, %c0_i32_0 : i32
    scf.if %2 {
      %cst_10 = arith.constant 0.000000e+00 : f32
      %18 = vector.broadcast %cst_10 : f32 to vector<8x128xf32>
      %c0_11 = arith.constant 0 : index
      %c0_12 = arith.constant 0 : index
      %19 = vector.load %arg4[%c0_11, %c0_12] : memref<8x128xf32, #tpu.memory_space<vmem>>, vector<8x128xf32>
      tpu.vector_store %arg4[%c0_11, %c0_12], %18 {strides = array<i32>} : memref<8x128xf32, #tpu.memory_space<vmem>>, vector<8x128xf32>,
    } else {
    }
    %c0 = arith.constant 0 : index
    %c0_1 = arith.constant 0 : index
    %3 = vector.load %arg2[%c0, %c0_1] : memref<16x128xf32, #tpu.memory_space<vmem>>, vector<16x128xf32>
    %c0_2 = arith.constant 0 : index
    %c0_3 = arith.constant 0 : index
    %4 = vector.load %arg3[%c0_2, %c0_3] : memref<16x128xf32, #tpu.memory_space<vmem>>, vector<16x128xf32>
    %5 = arith.subf %3, %4 : vector<16x128xf32>
    %6 = math.absf %5 : vector<16x128xf32>
    %cst = arith.constant 1.000000e+00 : f32
    %7 = vector.broadcast %cst : f32 to vector<16x128xf32>
    %8 = arith.minimumf %6, %7 : vector<16x128xf32>
    %cst_4 = arith.constant 5.000000e-01 : f32
    %9 = vector.broadcast %cst_4 : f32 to vector<16x128xf32>
    %10 = arith.mulf %9, %8 : vector<16x128xf32>
    %11 = arith.subf %6, %10 : vector<16x128xf32>
    %12 = arith.mulf %8, %11 : vector<16x128xf32>
    %c0_5 = arith.constant 0 : index
    %c0_6 = arith.constant 0 : index
    %13 = vector.load %arg4[%c0_5, %c0_6] : memref<8x128xf32, #tpu.memory_space<vmem>>, vector<8x128xf32>
    %14 = vector.shape_cast %12 : vector<16x128xf32> to vector<2x8x128xf32>
    %cst_7 = arith.constant dense<0.000000e+00> : vector<8x128xf32>
    %15 = vector.multi_reduction <add>, %14, %cst_7 [0] : vector<2x8x128xf32> to vector<8x128xf32>
    %16 = arith.addf %13, %15 : vector<8x128xf32>
    %c0_8 = arith.constant 0 : index
    %c0_9 = arith.constant 0 : index
    %17 = vector.load %arg4[%c0_8, %c0_9] : memref<8x128xf32, #tpu.memory_space<vmem>>, vector<8x128xf32>
    tpu.vector_store %arg4[%c0_8, %c0_9], %16 {strides = array<i32>} : memref<8x128xf32, #tpu.memory_space<vmem>>, vector<8x128xf32>,
    return
  }
  func.func @transform_0(%arg0: i32, %arg1: i32) -> (i32, i32) {
    %c1_i32 = arith.constant 1 : i32
    %0 = arith.muli %arg0, %c1_i32 : i32
    %1 = arith.addi %0, %arg1 : i32
    %c0_i32 = arith.constant 0 : i32
    %c0_i32_0 = arith.constant 0 : i32
    return %1, %c0_i32 : i32, i32
  }
  func.func @transform_1(%arg0: i32, %arg1: i32) -> (i32, i32) {
    %c1_i32 = arith.constant 1 : i32
    %0 = arith.muli %arg0, %c1_i32 : i32
    %1 = arith.addi %0, %arg1 : i32
    %c0_i32 = arith.constant 0 : i32
    %c0_i32_0 = arith.constant 0 : i32
    return %1, %c0_i32 : i32, i32
  }
  func.func @transform_2(%arg0: i32, %arg1: i32) -> (i32, i32) {
    %c0_i32 = arith.constant 0 : i32
    %c0_i32_0 = arith.constant 0 : i32
    return %arg0, %c0_i32 : i32, i32
  }
}

</mosaic_0001>

<llo_original>
// kernel: smooth_l1_loss.1
$region0: #{smooth_l1_loss.1}
  #allocation0 [shape = 'u32[]', space=smem, size = 0x4, offset = 0x4, fixed_abs, tag = 'smem constant byte address 0x4 - core index']
  #allocation1 [shape = 'u32[144,128]{1,0:T(1,128)}', space=vmem, size = 0x12000, scoped, tag = 'internal scratch']
  %s0 = inlined_call_operand.vmem [shape: f32[16,128], index: 0, kind: input, shape index: {}]
  %s1 = inlined_call_operand.vmem [shape: f32[16,128], index: 1, kind: input, shape index: {}]
  %s2 = inlined_call_operand.vmem [shape: f32[8,128], index: 2, kind: output, shape index: {}]
  %s3 = sld [smem:[#allocation0]]
  $region22: #{smooth_l1_loss.1} parent=0
    _
  %s5 = ssub.s32 1, %s3
  %s6 = scalar_select 0, %s5, %s3
  // Predicated region
  $region2: #{smooth_l1_loss.1} parent=0 // pred_check
    _
  $region3: #{smooth_l1_loss.1} parent=0 // pred_check_branch
    %8 = sbr.rel (0) target = $region5
  $region4: #{smooth_l1_loss.1} parent=0 // pred_region
    %s9 = sadd.s32 0, 0
    %s10 = smul.u32 2, %s9
    %p11 = scmp.lt.s32.totalorder %s10, 1
    %s12 = scalar_select %p11, %s10, 1
    %s13 = smul.addr %s12, 8
    %s14 = scalar_lea.vmem %s0, %s13
    %s15 = sadd.s32 0, 0
    %s16 = smul.u32 2, %s15
  $region5: #{smooth_l1_loss.1} parent=0 // pred_fallthru
    _
  // Predicated region
  $region6: #{smooth_l1_loss.1} parent=0 // pred_check
    _
  $region7: #{smooth_l1_loss.1} parent=0 // pred_check_branch
    %18 = sbr.rel (0) target = $region9
  $region8: #{smooth_l1_loss.1} parent=0 // pred_region
    %s19 = sadd.s32 0, 0
    %s20 = smul.u32 2, %s19
    %p21 = scmp.lt.s32.totalorder %s20, 1
    %s22 = scalar_select %p21, %s20, 1
    %s23 = smul.addr %s22, 8
    %s24 = scalar_lea.vmem %s1, %s23
    %s25 = sadd.s32 0, 0
    %s26 = smul.u32 2, %s25
  $region9: #{smooth_l1_loss.1} parent=0 // pred_fallthru
    _
  %s27 = sadd.s32 0, 0
  %s28 = smul.u32 2, %s27
  %p29 = scmp.lt.s32.totalorder %s28, 1
  %s30 = scalar_select %p29, %s28, 1
  %s31 = smul.addr %s30, 8
  %s32 = scalar_lea.vmem %s0, %s31
  %s33 = sadd.s32 0, 0
  %s34 = smul.u32 2, %s33
  %p35 = scmp.lt.s32.totalorder %s34, 1
  %s36 = scalar_select %p35, %s34, 1
  %s37 = smul.addr %s36, 8
  %s38 = scalar_lea.vmem %s1, %s37
  %s39 = sadd.s32 0, 0
  %s40 = smul.u32 2, %s39
  %p41 = scmp.lt.s32.totalorder %s40, 1
  %s42 = scalar_select %p41, %s40, 1
  %s43 = smul.addr %s42, 8
  %s44 = scalar_lea.vmem %s0, %s43
  %s45 = sadd.s32 0, 0
  %s46 = smul.u32 2, %s45
  %s47 = sadd.s32 0, 0
  %s48 = smul.u32 2, %s47
  %p49 = scmp.lt.s32.totalorder %s48, 1
  %s50 = scalar_select %p49, %s48, 1
  %s51 = smul.addr %s50, 8
  %s52 = scalar_lea.vmem %s1, %s51
  %s53 = sadd.s32 0, 0
  %s54 = smul.u32 2, %s53
  %p55 = scmp.eq.s32.totalorder 0, 0
  // Predicated region
  $region10: #{smooth_l1_loss.1} parent=0 // pred_check
    %p56 = pneg %p55
  $region11: #{smooth_l1_loss.1} parent=0 // pred_check_branch
    %58 = sbr.rel (%p56) target = $region13
  $region12: #{smooth_l1_loss.1} parent=0 // pred_region
    %59 = vst [vmem:[%s2] sm:$0xff] 0.0
  $region13: #{smooth_l1_loss.1} parent=0 // pred_fallthru
    _
  %v60 = vld [vmem:[%s44] sm:$0xff]
  %v61 = vld [vmem:[%s44 + $0x8] sm:$0xff]
  %v62 = vld [vmem:[%s52] sm:$0xff]
  %v63 = vld [vmem:[%s52 + $0x8] sm:$0xff]
  %v64 = vsub.f32 %v60, %v62
  %v65 = vsub.f32 %v61, %v63
  %v66 = vand.u32 2147483647, %v64
  %v67 = vand.u32 2147483647, %v65
  %v68 = vmin.f32 %v66, 1.0
  %v69 = vmin.f32 %v67, 1.0
  %v70 = vmul.f32 %v68, 0.5
  %v71 = vmul.f32 %v69, 0.5
  %v72 = vsub.f32 %v66, %v70
  %v73 = vsub.f32 %v67, %v71
  %v74 = vmul.f32 %v68, %v72
  %v75 = vmul.f32 %v69, %v73
  %v76 = vld [vmem:[%s2] sm:$0xff]
  %v77 = vadd.f32 %v74, %v75
  %v78 = vadd.f32 %v76, %v77
  %79 = vst [vmem:[%s2] sm:$0xff] %v78
  // Predicated region
  $region14: #{smooth_l1_loss.1} parent=0 // pred_check
    _
  $region15: #{smooth_l1_loss.1} parent=0 // pred_check_branch
    %81 = sbr.rel (0) target = $region17
  $region16: #{smooth_l1_loss.1} parent=0 // pred_region
    _
  $region17: #{smooth_l1_loss.1} parent=0 // pred_fallthru
    _
  // Predicated region
  $region18: #{smooth_l1_loss.1} parent=0 // pred_check
    _
  $region19: #{smooth_l1_loss.1} parent=0 // pred_check_branch
    %83 = sbr.rel (0) target = $region21
  $region20: #{smooth_l1_loss.1} parent=0 // pred_region
    _
  $region21: #{smooth_l1_loss.1} parent=0 // pred_fallthru
    _

</llo_original>
